<compile_context>
chip_gen: v7x
topology: tpu7x:2x2x1
jax: 0.10.0
libtpu: 0.0.40
codegen_flags: <defaults>
</compile_context>

<pallas_src>
import jax
import jax.numpy as jnp
from jax.experimental import pallas as pl
from jax.experimental.pallas import tpu as pltpu


def linear_kernel(x_ref, w_ref, b_ref, out_ref):
    """One (tm, N) output slab: full-K matmul + bias, no reduction grid axis."""
    # In-kernel cast: read f32 x from HBM once, cast on the VPU (huge slack).
    x_bf = x_ref[...].astype(w_ref.dtype)
    acc = jnp.dot(x_bf, w_ref[...], preferred_element_type=jnp.float32)
    out_ref[...] = (acc + b_ref[...]).astype(out_ref.dtype)


def prepare_projection_params(weight, bias, *, compute_dtype=jnp.bfloat16):
    """One-time parameter prep (in a real model this lives at module init).

    weight: (N, K) f32 (PyTorch (out_features, in_features) convention)
    bias:   (N,)   f32
    Returns (W^T as (K, N) compute_dtype, bias as (1, N) f32).
    """
    w_t = weight.T.astype(compute_dtype)            # (K, N), lane-dense on N
    b_row = bias.reshape(1, -1).astype(jnp.float32)  # (1, N)
    return w_t, b_row


def protein_projection(x, w_t, b_row, *, block_m=512, out_dtype=None):
    """out = x @ W^T + b   (PyTorch nn.Linear forward semantics).

    x:     (M, K)  float32
    w_t:   (K, N)  bf16, from prepare_projection_params
    b_row: (1, N)  float32
    """
    M, K = x.shape
    K2, N = w_t.shape
    assert K == K2, "weight in_features must match x feature dim"
    assert b_row.shape == (1, N)
    out_dtype = x.dtype if out_dtype is None else out_dtype

    # Single M grid axis; K and N are one VMEM-resident block each.
    # TODO(synk): for much larger K/N (won't fit VMEM) reintroduce a K/N-tiled
    # path; for ragged M, pad to a multiple of the tile and mask the tail.
    tm = min(block_m, M)
    # Keep >= 2 parallel M steps when possible so both v7x TensorCores work.
    if M // tm < 2 and M % 2 == 0 and (M // 2) % 8 == 0:
        tm = M // 2
    assert M % tm == 0, "batch dim must be divisible by the chosen M tile"

    grid = (M // tm,)

    bytes_accessed = (x.size * x.dtype.itemsize
                      + w_t.size * w_t.dtype.itemsize
                      + b_row.size * 4
                      + M * N * jnp.dtype(out_dtype).itemsize)
    cost = pl.CostEstimate(flops=2 * M * N * K,
                           transcendentals=0,
                           bytes_accessed=bytes_accessed)

    return pl.pallas_call(
        linear_kernel,
        out_shape=jax.ShapeDtypeStruct((M, N), out_dtype),
        grid_spec=pltpu.PrefetchScalarGridSpec(
            num_scalar_prefetch=0,
            grid=grid,
            in_specs=[
                pl.BlockSpec((tm, K), lambda i: (i, 0)),   # x slab (f32)
                pl.BlockSpec((K, N), lambda i: (0, 0)),    # whole W^T (bf16)
                pl.BlockSpec((1, N), lambda i: (0, 0)),    # bias row (f32)
            ],
            out_specs=pl.BlockSpec((tm, N), lambda i: (i, 0)),
        ),
        compiler_params=pltpu.CompilerParams(
            dimension_semantics=("parallel",)),
        cost_estimate=cost,
    )(x, w_t, b_row)


def protein_projection_ref_f32(x, weight, bias):
    """Pure-f32 reference mirroring the PyTorch forward."""
    return x @ weight.T + bias


def protein_projection_ref_bf16(x, weight, bias):
    """Reference at the kernel's MXU precision (bf16 inputs, f32 accumulate)."""
    return jnp.dot(x.astype(jnp.bfloat16), weight.T.astype(jnp.bfloat16),
                   preferred_element_type=jnp.float32) + bias


if __name__ == "__main__":
    # Small shapes consistent with a protein-embedding projection.
    batch, input_dim, output_dim = 256, 384, 256

    key = jax.random.PRNGKey(0)
    kx, kw, kb = jax.random.split(key, 3)
    scale = 1.0 / (input_dim ** 0.5)
    weight = jax.random.uniform(kw, (output_dim, input_dim), jnp.float32,
                                -scale, scale)
    bias = jax.random.uniform(kb, (output_dim,), jnp.float32, -scale, scale)
    x = jax.random.normal(kx, (batch, input_dim), jnp.float32)

    # One-time parameter prep (transpose + bf16 cast hoisted out of the call).
    w_t, b_row = prepare_projection_params(weight, bias)

    out = protein_projection(x, w_t, b_row)
    out = jax.block_until_ready(out)
    assert out.shape == (batch, output_dim)

    # Exact-precision check: same bf16 MXU inputs, f32 accumulation.
    ref_bf16 = protein_projection_ref_bf16(x, weight, bias)
    err_bf16 = jnp.max(jnp.abs(out - ref_bf16))
    assert jnp.allclose(out, ref_bf16, atol=1e-4, rtol=1e-4), \
        f"bf16-matched max abs err {err_bf16}"

    # Semantic check vs the pure-f32 module forward (bf16 cast tolerance).
    ref_f32 = protein_projection_ref_f32(x, weight, bias)
    err_f32 = jnp.max(jnp.abs(out - ref_f32))
    assert jnp.allclose(out, ref_f32, atol=5e-2, rtol=5e-2), \
        f"f32 max abs err {err_f32}"

    print("KERNEL_OK")
</pallas_src>

<mosaic_0001>
module attributes {stable_mosaic.version = 11 : i64} {
  func.func @linear_kernel(%arg0: i32, %arg1: memref<128x384xf32, #tpu.memory_space<vmem>>, %arg2: memref<384x256xbf16, #tpu.memory_space<vmem>>, %arg3: memref<1x256xf32, #tpu.memory_space<vmem>>, %arg4: memref<128x256xf32, #tpu.memory_space<vmem>>) attributes {dimension_semantics = [#tpu.dimension_semantics<parallel>], iteration_bounds = array<i64: 2>, scalar_prefetch = 0 : i64, scratch_operands = 0 : i64, tpu.core_type = #tpu.core_type<tc>, window_params = [{transform_indices = @transform_0, window_bounds = array<i64: 128, 384>}, {pipeline_mode = #tpu.pipeline_mode<synchronous>, transform_indices = @transform_1, window_bounds = array<i64: 384, 256>}, {pipeline_mode = #tpu.pipeline_mode<synchronous>, transform_indices = @transform_2, window_bounds = array<i64: 1, 256>}, {transform_indices = @transform_3, window_bounds = array<i64: 128, 256>}]} {
    %c0 = arith.constant 0 : index
    %c0_0 = arith.constant 0 : index
    %0 = vector.load %arg1[%c0, %c0_0] : memref<128x384xf32, #tpu.memory_space<vmem>>, vector<128x384xf32>
    %1 = arith.truncf %0 : vector<128x384xf32> to vector<128x384xbf16>
    %c0_1 = arith.constant 0 : index
    %c0_2 = arith.constant 0 : index
    %2 = vector.load %arg2[%c0_1, %c0_2] : memref<384x256xbf16, #tpu.memory_space<vmem>>, vector<384x256xbf16>
    %cst = arith.constant dense<0.000000e+00> : vector<128x256xf32>
    %3 = tpu.matmul %1, %2, %cst {dimension_numbers = #tpu.dot_dimension_numbers<[1], [0], [0], [1], [0, 0, 1, 1], [], []>} : vector<128x384xbf16>, vector<384x256xbf16>, vector<128x256xf32> -> vector<128x256xf32>
    %c0_3 = arith.constant 0 : index
    %c0_4 = arith.constant 0 : index
    %4 = vector.load %arg3[%c0_3, %c0_4] : memref<1x256xf32, #tpu.memory_space<vmem>>, vector<1x256xf32>
    %5 = vector.broadcast %4 : vector<1x256xf32> to vector<128x256xf32>
    %6 = arith.addf %3, %5 : vector<128x256xf32>
    %c0_5 = arith.constant 0 : index
    %c0_6 = arith.constant 0 : index
    %7 = vector.load %arg4[%c0_5, %c0_6] : memref<128x256xf32, #tpu.memory_space<vmem>>, vector<128x256xf32>
    tpu.vector_store %arg4[%c0_5, %c0_6], %6 {strides = array<i32>} : memref<128x256xf32, #tpu.memory_space<vmem>>, vector<128x256xf32>,
    return
  }
  func.func @transform_0(%arg0: i32) -> (i32, i32) {
    %c0_i32 = arith.constant 0 : i32
    %c0_i32_0 = arith.constant 0 : i32
    return %arg0, %c0_i32 : i32, i32
  }
  func.func @transform_1(%arg0: i32) -> (i32, i32) {
    %c0_i32 = arith.constant 0 : i32
    %c0_i32_0 = arith.constant 0 : i32
    %c0_i32_1 = arith.constant 0 : i32
    return %c0_i32, %c0_i32_0 : i32, i32
  }
  func.func @transform_2(%arg0: i32) -> (i32, i32) {
    %c0_i32 = arith.constant 0 : i32
    %c0_i32_0 = arith.constant 0 : i32
    %c0_i32_1 = arith.constant 0 : i32
    return %c0_i32, %c0_i32_0 : i32, i32
  }
  func.func @transform_3(%arg0: i32) -> (i32, i32) {
    %c0_i32 = arith.constant 0 : i32
    %c0_i32_0 = arith.constant 0 : i32
    return %arg0, %c0_i32 : i32, i32
  }
}

</mosaic_0001>

<llo_original>
// kernel: tpu_custom_call.1
$region0: #{tpu_custom_call.1}
  #allocation0 [shape = 'u32[]', space=smem, size = 0x4, offset = 0x4, fixed_abs, tag = 'smem constant byte address 0x4 - core index']
  #allocation1 [shape = 'u32[144,128]{1,0:T(1,128)}', space=vmem, size = 0x12000, scoped, tag = 'internal scratch']
  %s0 = inlined_call_operand.hbm [shape: f32[256,384], index: 0, kind: input, shape index: {}]
  %s1 = inlined_call_operand.hbm [shape: bf16[384,256], index: 1, kind: input, shape index: {}]
  %s2 = inlined_call_operand.vmem [shape: f32[1,256], index: 2, kind: input, shape index: {}]
  %s3 = inlined_call_operand.hbm [shape: f32[256,256], index: 3, kind: output, shape index: {}]
  %s4 = sld [smem:[#allocation0]]
  $region53: #{tpu_custom_call.1} parent=0
    _
  %s6 = ssub.s32 1, %s4
  %s7 = scalar_select 0, %s6, %s4
  $region1: #{tpu_custom_call.1} parent=0
    #allocation2 [shape = 'u8[393216]{0}', space=vmem, size = 0x60000, scoped, tag = 'input window, operand 0']
    #allocation3 [shape = 's32[2]{0}', space=sflag, size = 0x8, scoped, tag = 'scoped memory for tpu_custom_call.1']
    #allocation4 [shape = 's32[2]{0}', space=sflag, size = 0x8, scoped, tag = 'scoped memory for tpu_custom_call.1']
    #allocation5 [shape = 'u8[196608]{0}', space=vmem, size = 0x30000, scoped, tag = 'input window, operand 1, single buffered']
    #allocation6 [shape = 's32[1]{0}', space=sflag, size = 0x4, scoped, tag = 'scoped memory for tpu_custom_call.1']
    #allocation7 [shape = 'u8[262144]{0}', space=vmem, size = 0x40000, scoped, tag = 'output window, operand 0']
    %8 = vsyncpa [#allocation3], 0
    %s9 = scalar_lea.sflag [#allocation3], 1
    %10 = vsyncpa %s9, 0
    %11 = vsyncpa [#allocation6], 0
    %12 = vsyncpa [#allocation4], 0
    %s13 = scalar_lea.sflag [#allocation4], 1
    %14 = vsyncpa %s13, 0
    loop: start=0, step=1, limit=4
    $region2: #{tpu_custom_call.1} parent=1 // loop_pre_header
      _
    $region3: #{tpu_custom_call.1} parent=1 // loop_header
      %s16 = sphi 0, %s20
      %p17 = scmp.ge.s32.totalorder %s16, 4
      %s26 = sphi 0, %s28
      %s29 = sphi 0, %s26
      %s30 = sphi 0, %s29
      %s46 = sphi 0, %s30
      %s50 = sphi 0, %s50
      %s52 = sphi 0, %s50
      %s53 = sphi 0, %s52
      %s67 = sphi 0, %s53
      %s71 = sphi 0, %s71
      %s73 = sphi 0, %s71
      %s74 = sphi 0, %s73
      %s88 = sphi 0, %s74
      %s94 = sphi 0, %s96
      %s97 = sphi 0, %s94
      %s98 = sphi 0, %s97
      %s114 = sphi 0, %s98
    $region4: #{tpu_custom_call.1} parent=1 // loop_header_branch
      %19 = sbr.rel (%p17) target = $region8
    $region5: #{tpu_custom_call.1} parent=1 // loop_body
      %s21 = ssub.s32 %s16, 1
      %s22 = ssub.s32 %s16, 2
      %s23 = sadd.s32 %s16, 1
      %s24 = ssub.s32 %s16, %s23
      %p25 = scmp.eq.s32.totalorder %s24, 0
      %s27 = sadd.s32 %s26, 1
      %s28 = scalar_select %p25, %s26, %s27
      %p31 = pneg %p25
      %p32 = scmp.eq.s32.totalorder %s16, 1
      %p33 = por %p31, %p32
      %p34 = scmp.ne.s32.totalorder %s26, %s29
      %p35 = scmp.eq.s32.totalorder %s16, 0
      %p36 = por %p34, %p35
      %p37 = scmp.ne.s32.totalorder %s26, %s29
      %p38 = scmp.eq.s32.totalorder %s21, 1
      %p39 = por %p37, %p38
      %p40 = scmp.ne.s32.totalorder %s29, %s30
      %p41 = scmp.eq.s32.totalorder %s21, 0
      %p42 = por %p40, %p41
      %p43 = scmp.ne.s32.totalorder %s29, %s30
      %p44 = scmp.eq.s32.totalorder %s22, 1
      %p45 = por %p43, %p44
      %p47 = scmp.ne.s32.totalorder %s30, %s46
      %p48 = scmp.eq.s32.totalorder %s22, 0
      %p49 = por %p47, %p48
      %s51 = sadd.s32 %s50, 1
      %p54 = scmp.eq.s32.totalorder %s16, 1
      %p55 = scmp.ne.s32.totalorder %s50, %s52
      %p56 = scmp.eq.s32.totalorder %s16, 0
      %p57 = por %p55, %p56
      %p58 = scmp.ne.s32.totalorder %s50, %s52
      %p59 = scmp.eq.s32.totalorder %s21, 1
      %p60 = por %p58, %p59
      %p61 = scmp.ne.s32.totalorder %s52, %s53
      %p62 = scmp.eq.s32.totalorder %s21, 0
      %p63 = por %p61, %p62
      %p64 = scmp.ne.s32.totalorder %s52, %s53
      %p65 = scmp.eq.s32.totalorder %s22, 1
      %p66 = por %p64, %p65
      %p68 = scmp.ne.s32.totalorder %s53, %s67
      %p69 = scmp.eq.s32.totalorder %s22, 0
      %p70 = por %p68, %p69
      %s72 = sadd.s32 %s71, 1
      %p75 = scmp.eq.s32.totalorder %s16, 1
      %p76 = scmp.ne.s32.totalorder %s71, %s73
      %p77 = scmp.eq.s32.totalorder %s16, 0
      %p78 = por %p76, %p77
      %p79 = scmp.ne.s32.totalorder %s71, %s73
      %p80 = scmp.eq.s32.totalorder %s21, 1
      %p81 = por %p79, %p80
      %p82 = scmp.ne.s32.totalorder %s73, %s74
      %p83 = scmp.eq.s32.totalorder %s21, 0
      %p84 = por %p82, %p83
      %p85 = scmp.ne.s32.totalorder %s73, %s74
      %p86 = scmp.eq.s32.totalorder %s22, 1
      %p87 = por %p85, %p86
      %p89 = scmp.ne.s32.totalorder %s74, %s88
      %p90 = scmp.eq.s32.totalorder %s22, 0
      %p91 = por %p89, %p90
      %s92 = ssub.s32 %s16, %s23
      %p93 = scmp.eq.s32.totalorder %s92, 0
      %s95 = sadd.s32 %s94, 1
      %s96 = scalar_select %p93, %s94, %s95
      %p99 = pneg %p93
      %p100 = scmp.eq.s32.totalorder %s16, 1
      %p101 = por %p99, %p100
      %p102 = scmp.ne.s32.totalorder %s94, %s97
      %p103 = scmp.eq.s32.totalorder %s16, 0
      %p104 = por %p102, %p103
      %p105 = scmp.ne.s32.totalorder %s94, %s97
      %p106 = scmp.eq.s32.totalorder %s21, 1
      %p107 = por %p105, %p106
      %p108 = scmp.ne.s32.totalorder %s97, %s98
      %p109 = scmp.eq.s32.totalorder %s21, 0
      %p110 = por %p108, %p109
      %p111 = scmp.ne.s32.totalorder %s97, %s98
      %p112 = scmp.eq.s32.totalorder %s22, 1
      %p113 = por %p111, %p112
      %p115 = scmp.ne.s32.totalorder %s98, %s114
      %p116 = scmp.eq.s32.totalorder %s22, 0
      %p117 = por %p115, %p116
      %p118 = scmp.le.s32.totalorder 1, %s16
      %p119 = scmp.lt.s32.totalorder %s16, 3
      %p120 = pnand %p118, %p119
      %p121 = pneg %p120
      // Predicated region
      $region9: #{tpu_custom_call.1} parent=5 // pred_check
        _
      $region10: #{tpu_custom_call.1} parent=5 // pred_check_branch
        %123 = sbr.rel (%p120) target = $region12
      $region11: #{tpu_custom_call.1} parent=5 // pred_region
        %s124 = ssub.s32 %s16, 1
        // Predicated region
        $region13: #{tpu_custom_call.1} parent=11 // pred_check
          %p125 = pneg %p63
        $region14: #{tpu_custom_call.1} parent=11 // pred_check_branch
          %127 = sbr.rel (%p125) target = $region16
        $region15: #{tpu_custom_call.1} parent=11 // pred_region
          %s129 = ssub.s32 6144, 6144
          %130 = vsyncadd [#allocation6], %s129
          %s131 = sshll.u32 [#allocation5], 4
          %s132 = int_to_ptr.vmem [resolvable:$true] %s131
          %137 = dma.hbm_to_vmem [thread:$0]  %s1, 6144, %s132, [#allocation6], 128, 128, 8
        $region16: #{tpu_custom_call.1} parent=11 // pred_fallthru
          _
        // Predicated region
        $region17: #{tpu_custom_call.1} parent=11 // pred_check
          %p138 = pneg %p84
        $region18: #{tpu_custom_call.1} parent=11 // pred_check_branch
          %140 = sbr.rel (%p138) target = $region20
        $region19: #{tpu_custom_call.1} parent=11 // pred_region
          _
        $region20: #{tpu_custom_call.1} parent=11 // pred_fallthru
          _
      $region12: #{tpu_custom_call.1} parent=5 // pred_fallthru
        _
      %p141 = scmp.lt.s32.totalorder %s16, 2
      // Predicated region
      $region21: #{tpu_custom_call.1} parent=5 // pred_check
        %p142 = pneg %p141
      $region22: #{tpu_custom_call.1} parent=5 // pred_check_branch
        %144 = sbr.rel (%p142) target = $region24
      $region23: #{tpu_custom_call.1} parent=5 // pred_region
        // Predicated region
        $region25: #{tpu_custom_call.1} parent=23 // pred_check
          %p145 = pneg %p36
        $region26: #{tpu_custom_call.1} parent=23 // pred_check_branch
          %147 = sbr.rel (%p145) target = $region28
        $region27: #{tpu_custom_call.1} parent=23 // pred_region
          %s148 = sand.u32 %s26, 1
          %s149 = scalar_lea.sflag [#allocation3], %s148
          %s150 = sand.u32 %s26, 1
          %s151 = smul.addr %s150, 384
          %s152 = scalar_lea.vmem [#allocation2], %s151
          %s153 = smul.u32 16, %s16
          %s155 = ssub.s32 6144, 6144
          %156 = vsyncadd %s149, %s155
          %s157 = smul.addr %s153, 3
          %s158 = smul.addr %s157, 128
          %s159 = scalar_lea.hbm %s0, %s158
          %s160 = sshll.u32 %s152, 4
          %s161 = int_to_ptr.vmem [resolvable:$true] %s160
          %166 = dma.hbm_to_vmem [thread:$0]  %s159, 6144, %s161, %s149, 384, 384, 24
        $region28: #{tpu_custom_call.1} parent=23 // pred_fallthru
          _
      $region24: #{tpu_custom_call.1} parent=5 // pred_fallthru
        _
      %p167 = scmp.le.s32.totalorder 1, %s16
      %p168 = scmp.lt.s32.totalorder %s16, 3
      %p169 = pnand %p167, %p168
      %p170 = pneg %p169
      // Predicated region
      $region29: #{tpu_custom_call.1} parent=5 // pred_check
        _
      $region30: #{tpu_custom_call.1} parent=5 // pred_check_branch
        %172 = sbr.rel (%p169) target = $region32
      $region31: #{tpu_custom_call.1} parent=5 // pred_region
        %s173 = ssub.s32 %s16, 1
        %s174 = sand.u32 %s29, 1
        %s175 = scalar_lea.sflag [#allocation3], %s174
        %s176 = sand.u32 %s29, 1
        %s177 = smul.addr %s176, 384
        %s178 = scalar_lea.vmem [#allocation2], %s177
        // Predicated region
        $region33: #{tpu_custom_call.1} parent=31 // pred_check
          %p179 = pneg %p42
        $region34: #{tpu_custom_call.1} parent=31 // pred_check_branch
          %181 = sbr.rel (%p179) target = $region36
        $region35: #{tpu_custom_call.1} parent=31 // pred_region
          %182 = dma.done %s175, 6144
        $region36: #{tpu_custom_call.1} parent=31 // pred_fallthru
          _
        // Predicated region
        $region37: #{tpu_custom_call.1} parent=31 // pred_check
          %p183 = pneg %p63
        $region38: #{tpu_custom_call.1} parent=31 // pred_check_branch
          %185 = sbr.rel (%p183) target = $region40
        $region39: #{tpu_custom_call.1} parent=31 // pred_region
          %186 = dma.done [#allocation6], 6144
        $region40: #{tpu_custom_call.1} parent=31 // pred_fallthru
          _
        %s187 = sand.u32 %s29, 1
        %s188 = scalar_lea.sflag [#allocation3], %s187
        %s189 = sand.u32 %s29, 1
        %s190 = smul.addr %s189, 384
        %s191 = scalar_lea.vmem [#allocation2], %s190
        %p192 = pneg %p42
        %p193 = pneg %p39
        %p194 = pneg %p63
        %p195 = pneg %p60
        %p196 = pneg %p84
        %p197 = pneg %p81
        %p198 = pneg %p110
        %p199 = pneg %p107
        %s200 = sand.u32 %s97, 1
        %s201 = scalar_lea.sflag [#allocation4], %s200
        %s202 = sand.u32 %s97, 1
        %s203 = smul.addr %s202, 256
        %s204 = scalar_lea.vmem [#allocation7], %s203
        %s205 = smul.u32 16, %s21
        %s206 = smul.u32 16, %s21
        %v208 = vld [vmem:[%s178] sm:$0xff]
        %v209 = vld [vmem:[%s178 + $0x8] sm:$0xff]
        %v210 = vld [vmem:[%s178 + $0x10] sm:$0xff]
        %v211 = vld [vmem:[%s178 + $0x18] sm:$0xff]
        %v212 = vld [vmem:[%s178 + $0x20] sm:$0xff]
        %v213 = vld [vmem:[%s178 + $0x28] sm:$0xff]
        %v214 = vld [vmem:[%s178 + $0x30] sm:$0xff]
        %v215 = vld [vmem:[%s178 + $0x38] sm:$0xff]
        %v216 = vld [vmem:[%s178 + $0x40] sm:$0xff]
        %v217 = vld [vmem:[%s178 + $0x48] sm:$0xff]
        %v218 = vld [vmem:[%s178 + $0x50] sm:$0xff]
        %v219 = vld [vmem:[%s178 + $0x58] sm:$0xff]
        %v220 = vld [vmem:[%s178 + $0x60] sm:$0xff]
        %v221 = vld [vmem:[%s178 + $0x68] sm:$0xff]
        %v222 = vld [vmem:[%s178 + $0x70] sm:$0xff]
        %v223 = vld [vmem:[%s178 + $0x78] sm:$0xff]
        %v224 = vld [vmem:[%s178 + $0x80] sm:$0xff]
        %v225 = vld [vmem:[%s178 + $0x88] sm:$0xff]
        %v226 = vld [vmem:[%s178 + $0x90] sm:$0xff]
        %v227 = vld [vmem:[%s178 + $0x98] sm:$0xff]
        %v228 = vld [vmem:[%s178 + $0xa0] sm:$0xff]
        %v229 = vld [vmem:[%s178 + $0xa8] sm:$0xff]
        %v230 = vld [vmem:[%s178 + $0xb0] sm:$0xff]
        %v231 = vld [vmem:[%s178 + $0xb8] sm:$0xff]
        %v232 = vld [vmem:[%s178 + $0xc0] sm:$0xff]
        %v233 = vld [vmem:[%s178 + $0xc8] sm:$0xff]
        %v234 = vld [vmem:[%s178 + $0xd0] sm:$0xff]
        %v235 = vld [vmem:[%s178 + $0xd8] sm:$0xff]
        %v236 = vld [vmem:[%s178 + $0xe0] sm:$0xff]
        %v237 = vld [vmem:[%s178 + $0xe8] sm:$0xff]
        %v238 = vld [vmem:[%s178 + $0xf0] sm:$0xff]
        %v239 = vld [vmem:[%s178 + $0xf8] sm:$0xff]
        %v240 = vld [vmem:[%s178 + $0x100] sm:$0xff]
        %v241 = vld [vmem:[%s178 + $0x108] sm:$0xff]
        %v242 = vld [vmem:[%s178 + $0x110] sm:$0xff]
        %v243 = vld [vmem:[%s178 + $0x118] sm:$0xff]
        %v244 = vld [vmem:[%s178 + $0x120] sm:$0xff]
        %v245 = vld [vmem:[%s178 + $0x128] sm:$0xff]
        %v246 = vld [vmem:[%s178 + $0x130] sm:$0xff]
        %v247 = vld [vmem:[%s178 + $0x138] sm:$0xff]
        %v248 = vld [vmem:[%s178 + $0x140] sm:$0xff]
        %v249 = vld [vmem:[%s178 + $0x148] sm:$0xff]
        %v250 = vld [vmem:[%s178 + $0x150] sm:$0xff]
        %v251 = vld [vmem:[%s178 + $0x158] sm:$0xff]
        %v252 = vld [vmem:[%s178 + $0x160] sm:$0xff]
        %v253 = vld [vmem:[%s178 + $0x168] sm:$0xff]
        %v254 = vld [vmem:[%s178 + $0x170] sm:$0xff]
        %v255 = vld [vmem:[%s178 + $0x178] sm:$0xff]
        %v256 = vpack.c.bf16 %v211, %v208
        %v257 = vpack.c.bf16 %v212, %v209
        %v258 = vpack.c.bf16 %v213, %v210
        %v259 = vpack.c.bf16 %v217, %v214
        %v260 = vpack.c.bf16 %v218, %v215
        %v261 = vpack.c.bf16 %v219, %v216
        %v262 = vpack.c.bf16 %v223, %v220
        %v263 = vpack.c.bf16 %v224, %v221
        %v264 = vpack.c.bf16 %v225, %v222
        %v265 = vpack.c.bf16 %v229, %v226
        %v266 = vpack.c.bf16 %v230, %v227
        %v267 = vpack.c.bf16 %v231, %v228
        %v268 = vpack.c.bf16 %v235, %v232
        %v269 = vpack.c.bf16 %v236, %v233
        %v270 = vpack.c.bf16 %v237, %v234
        %v271 = vpack.c.bf16 %v241, %v238
        %v272 = vpack.c.bf16 %v242, %v239
        %v273 = vpack.c.bf16 %v243, %v240
        %v274 = vpack.c.bf16 %v247, %v244
        %v275 = vpack.c.bf16 %v248, %v245
        %v276 = vpack.c.bf16 %v249, %v246
        %v277 = vpack.c.bf16 %v253, %v250
        %v278 = vpack.c.bf16 %v254, %v251
        %v279 = vpack.c.bf16 %v255, %v252
        %v280 = vld [vmem:[#allocation5] sm:$0xff]
        %v281 = vld [vmem:[#allocation5 + $0x8] sm:$0xff]
        %v282 = vld [vmem:[#allocation5 + $0x10] sm:$0xff]
        %v283 = vld [vmem:[#allocation5 + $0x18] sm:$0xff]
        %v284 = vld [vmem:[#allocation5 + $0x20] sm:$0xff]
        %v285 = vld [vmem:[#allocation5 + $0x28] sm:$0xff]
        %v286 = vld [vmem:[#allocation5 + $0x30] sm:$0xff]
        %v287 = vld [vmem:[#allocation5 + $0x38] sm:$0xff]
        %v288 = vld [vmem:[#allocation5 + $0x40] sm:$0xff]
        %v289 = vld [vmem:[#allocation5 + $0x48] sm:$0xff]
        %v290 = vld [vmem:[#allocation5 + $0x50] sm:$0xff]
        %v291 = vld [vmem:[#allocation5 + $0x58] sm:$0xff]
        %v292 = vld [vmem:[#allocation5 + $0x60] sm:$0xff]
        %v293 = vld [vmem:[#allocation5 + $0x68] sm:$0xff]
        %v294 = vld [vmem:[#allocation5 + $0x70] sm:$0xff]
        %v295 = vld [vmem:[#allocation5 + $0x78] sm:$0xff]
        %v296 = vld [vmem:[#allocation5 + $0x80] sm:$0xff]
        %v297 = vld [vmem:[#allocation5 + $0x88] sm:$0xff]
        %v298 = vld [vmem:[#allocation5 + $0x90] sm:$0xff]
        %v299 = vld [vmem:[#allocation5 + $0x98] sm:$0xff]
        %v300 = vld [vmem:[#allocation5 + $0xa0] sm:$0xff]
        %v301 = vld [vmem:[#allocation5 + $0xa8] sm:$0xff]
        %v302 = vld [vmem:[#allocation5 + $0xb0] sm:$0xff]
        %v303 = vld [vmem:[#allocation5 + $0xb8] sm:$0xff]
        %v304 = vld [vmem:[#allocation5 + $0xc0] sm:$0xff]
        %v305 = vld [vmem:[#allocation5 + $0xc8] sm:$0xff]
        %v306 = vld [vmem:[#allocation5 + $0xd0] sm:$0xff]
        %v307 = vld [vmem:[#allocation5 + $0xd8] sm:$0xff]
        %v308 = vld [vmem:[#allocation5 + $0xe0] sm:$0xff]
        %v309 = vld [vmem:[#allocation5 + $0xe8] sm:$0xff]
        %v310 = vld [vmem:[#allocation5 + $0xf0] sm:$0xff]
        %v311 = vld [vmem:[#allocation5 + $0xf8] sm:$0xff]
        %v312 = vld [vmem:[#allocation5 + $0x100] sm:$0xff]
        %v313 = vld [vmem:[#allocation5 + $0x108] sm:$0xff]
        %v314 = vld [vmem:[#allocation5 + $0x110] sm:$0xff]
        %v315 = vld [vmem:[#allocation5 + $0x118] sm:$0xff]
        %v316 = vld [vmem:[#allocation5 + $0x120] sm:$0xff]
        %v317 = vld [vmem:[#allocation5 + $0x128] sm:$0xff]
        %v318 = vld [vmem:[#allocation5 + $0x130] sm:$0xff]
        %v319 = vld [vmem:[#allocation5 + $0x138] sm:$0xff]
        %v320 = vld [vmem:[#allocation5 + $0x140] sm:$0xff]
        %v321 = vld [vmem:[#allocation5 + $0x148] sm:$0xff]
        %v322 = vld [vmem:[#allocation5 + $0x150] sm:$0xff]
        %v323 = vld [vmem:[#allocation5 + $0x158] sm:$0xff]
        %v324 = vld [vmem:[#allocation5 + $0x160] sm:$0xff]
        %v325 = vld [vmem:[#allocation5 + $0x168] sm:$0xff]
        %v326 = vld [vmem:[#allocation5 + $0x170] sm:$0xff]
        %v327 = vld [vmem:[#allocation5 + $0x178] sm:$0xff]
        %v328 = vld [vmem:[%s2] sm:$0x3]
        %v330 = vlaneseq
        %v331 = vshrl.u32 %v330, 7
        %v332 = vsub.s32 0, %v331
        %v333 = vrot.slane %v328, %v332
        %v334 = vlaneseq
        %v335 = vshrl.u32 %v334, 7
        %v336 = vsub.s32 1, %v335
        %v337 = vrot.slane %v328, %v336
        %v388 = vunpack.c.l.b16 %v280
        %v389 = vunpack.c.h.b16 %v280
        %v390 = vunpack.c.l.b16 %v281
        %v391 = vunpack.c.h.b16 %v281
        %v392 = vunpack.c.l.b16 %v282
        %v393 = vunpack.c.h.b16 %v282
        %v394 = vunpack.c.l.b16 %v283
        %v395 = vunpack.c.h.b16 %v283
        %v396 = vunpack.c.l.b16 %v284
        %v397 = vunpack.c.h.b16 %v284
        %v398 = vunpack.c.l.b16 %v285
        %v399 = vunpack.c.h.b16 %v285
        %v400 = vunpack.c.l.b16 %v286
        %v401 = vunpack.c.h.b16 %v286
        %v402 = vunpack.c.l.b16 %v287
        %v403 = vunpack.c.h.b16 %v287
        %v404 = vunpack.c.l.b16 %v288
        %v405 = vunpack.c.h.b16 %v288
        %v406 = vunpack.c.l.b16 %v289
        %v407 = vunpack.c.h.b16 %v289
        %v408 = vunpack.c.l.b16 %v290
        %v409 = vunpack.c.h.b16 %v290
        %v410 = vunpack.c.l.b16 %v291
        %v411 = vunpack.c.h.b16 %v291
        %v412 = vunpack.c.l.b16 %v292
        %v413 = vunpack.c.h.b16 %v292
        %v414 = vunpack.c.l.b16 %v293
        %v415 = vunpack.c.h.b16 %v293
        %v416 = vunpack.c.l.b16 %v294
        %v417 = vunpack.c.h.b16 %v294
        %v418 = vunpack.c.l.b16 %v295
        %v419 = vunpack.c.h.b16 %v295
        %v420 = vunpack.c.l.b16 %v296
        %v421 = vunpack.c.h.b16 %v296
        %v422 = vunpack.c.l.b16 %v297
        %v423 = vunpack.c.h.b16 %v297
        %v424 = vunpack.c.l.b16 %v298
        %v425 = vunpack.c.h.b16 %v298
        %v426 = vunpack.c.l.b16 %v299
        %v427 = vunpack.c.h.b16 %v299
        %v428 = vunpack.c.l.b16 %v300
        %v429 = vunpack.c.h.b16 %v300
        %v430 = vunpack.c.l.b16 %v301
        %v431 = vunpack.c.h.b16 %v301
        %v432 = vunpack.c.l.b16 %v302
        %v433 = vunpack.c.h.b16 %v302
        %v434 = vunpack.c.l.b16 %v303
        %v435 = vunpack.c.h.b16 %v303
        %v436 = vunpack.c.l.b16 %v304
        %v437 = vunpack.c.h.b16 %v304
        %v438 = vunpack.c.l.b16 %v305
        %v439 = vunpack.c.h.b16 %v305
        %v440 = vunpack.c.l.b16 %v306
        %v441 = vunpack.c.h.b16 %v306
        %v442 = vunpack.c.l.b16 %v307
        %v443 = vunpack.c.h.b16 %v307
        %v444 = vunpack.c.l.b16 %v308
        %v445 = vunpack.c.h.b16 %v308
        %v446 = vunpack.c.l.b16 %v309
        %v447 = vunpack.c.h.b16 %v309
        %v448 = vunpack.c.l.b16 %v310
        %v449 = vunpack.c.h.b16 %v310
        %v450 = vunpack.c.l.b16 %v311
        %v451 = vunpack.c.h.b16 %v311
        %v452 = vunpack.c.l.b16 %v312
        %v453 = vunpack.c.h.b16 %v312
        %v454 = vunpack.c.l.b16 %v313
        %v455 = vunpack.c.h.b16 %v313
        %v456 = vunpack.c.l.b16 %v314
        %v457 = vunpack.c.h.b16 %v314
        %v458 = vunpack.c.l.b16 %v315
        %v459 = vunpack.c.h.b16 %v315
        %v460 = vunpack.c.l.b16 %v316
        %v461 = vunpack.c.h.b16 %v316
        %v462 = vunpack.c.l.b16 %v317
        %v463 = vunpack.c.h.b16 %v317
        %v464 = vunpack.c.l.b16 %v318
        %v465 = vunpack.c.h.b16 %v318
        %v466 = vunpack.c.l.b16 %v319
        %v467 = vunpack.c.h.b16 %v319
        %v468 = vunpack.c.l.b16 %v320
        %v469 = vunpack.c.h.b16 %v320
        %v470 = vunpack.c.l.b16 %v321
        %v471 = vunpack.c.h.b16 %v321
        %v472 = vunpack.c.l.b16 %v322
        %v473 = vunpack.c.h.b16 %v322
        %v474 = vunpack.c.l.b16 %v323
        %v475 = vunpack.c.h.b16 %v323
        %v476 = vunpack.c.l.b16 %v324
        %v477 = vunpack.c.h.b16 %v324
        %v478 = vunpack.c.l.b16 %v325
        %v479 = vunpack.c.h.b16 %v325
        %v480 = vunpack.c.l.b16 %v326
        %v481 = vunpack.c.h.b16 %v326
        %v482 = vunpack.c.l.b16 %v327
        %v483 = vunpack.c.h.b16 %v327
        %v484 = vpack.c.b16 %v390, %v388
        %v485 = vpack.c.b16 %v391, %v389
        %v486 = vpack.c.b16 %v394, %v392
        %v487 = vpack.c.b16 %v395, %v393
        %v488 = vpack.c.b16 %v398, %v396
        %v489 = vpack.c.b16 %v399, %v397
        %v490 = vpack.c.b16 %v402, %v400
        %v491 = vpack.c.b16 %v403, %v401
        %v492 = vpack.c.b16 %v406, %v404
        %v493 = vpack.c.b16 %v407, %v405
        %v494 = vpack.c.b16 %v410, %v408
        %v495 = vpack.c.b16 %v411, %v409
        %v496 = vpack.c.b16 %v414, %v412
        %v497 = vpack.c.b16 %v415, %v413
        %v498 = vpack.c.b16 %v418, %v416
        %v499 = vpack.c.b16 %v419, %v417
        %v500 = vpack.c.b16 %v422, %v420
        %v501 = vpack.c.b16 %v423, %v421
        %v502 = vpack.c.b16 %v426, %v424
        %v503 = vpack.c.b16 %v427, %v425
        %v504 = vpack.c.b16 %v430, %v428
        %v505 = vpack.c.b16 %v431, %v429
        %v506 = vpack.c.b16 %v434, %v432
        %v507 = vpack.c.b16 %v435, %v433
        %v508 = vpack.c.b16 %v438, %v436
        %v509 = vpack.c.b16 %v439, %v437
        %v510 = vpack.c.b16 %v442, %v440
        %v511 = vpack.c.b16 %v443, %v441
        %v512 = vpack.c.b16 %v446, %v444
        %v513 = vpack.c.b16 %v447, %v445
        %v514 = vpack.c.b16 %v450, %v448
        %v515 = vpack.c.b16 %v451, %v449
        %v516 = vpack.c.b16 %v454, %v452
        %v517 = vpack.c.b16 %v455, %v453
        %v518 = vpack.c.b16 %v458, %v456
        %v519 = vpack.c.b16 %v459, %v457
        %v520 = vpack.c.b16 %v462, %v460
        %v521 = vpack.c.b16 %v463, %v461
        %v522 = vpack.c.b16 %v466, %v464
        %v523 = vpack.c.b16 %v467, %v465
        %v524 = vpack.c.b16 %v470, %v468
        %v525 = vpack.c.b16 %v471, %v469
        %v526 = vpack.c.b16 %v474, %v472
        %v527 = vpack.c.b16 %v475, %v473
        %v528 = vpack.c.b16 %v478, %v476
        %v529 = vpack.c.b16 %v479, %v477
        %v530 = vpack.c.b16 %v482, %v480
        %v531 = vpack.c.b16 %v483, %v481
        %580 = vmatprep.subr.bf16.mxu0 %v485
        %581 = vmatpush1.bf16.msra.mxu0 %v484
        %582 = vmatprep.subr.bf16.mxu0 %v487
        %583 = vmatpush1.bf16.msra.mxu0 %v486
        %584 = vmatprep.subr.bf16.mxu0 %v489
        %585 = vmatpush1.bf16.msra.mxu0 %v488
        %586 = vmatprep.subr.bf16.mxu0 %v491
        %587 = vmatpush1.bf16.msra.mxu0 %v490
        %588 = vmatprep.subr.bf16.mxu0 %v493
        %589 = vmatpush1.bf16.msra.mxu0 %v492
        %590 = vmatprep.subr.bf16.mxu0 %v495
        %591 = vmatpush1.bf16.msra.mxu0 %v494
        %592 = vmatprep.subr.bf16.mxu0 %v497
        %593 = vmatpush1.bf16.msra.mxu0 %v496
        %594 = vmatprep.subr.bf16.mxu0 %v499
        %595 = vmatpush1.bf16.msra.mxu0 %v498
        %596 = vmatprep.subr.bf16.mxu0 %v501
        %597 = vmatpush1.bf16.msra.mxu0 %v500
        %598 = vmatprep.subr.bf16.mxu0 %v503
        %599 = vmatpush1.bf16.msra.mxu0 %v502
        %600 = vmatprep.subr.bf16.mxu0 %v505
        %601 = vmatpush1.bf16.msra.mxu0 %v504
        %602 = vmatprep.subr.bf16.mxu0 %v507
        %603 = vmatpush1.bf16.msra.mxu0 %v506
        %604 = vmatprep.subr.bf16.mxu0 %v509
        %605 = vmatpush1.bf16.msra.mxu0 %v508
        %606 = vmatprep.subr.bf16.mxu0 %v511
        %607 = vmatpush1.bf16.msra.mxu0 %v510
        %608 = vmatprep.subr.bf16.mxu0 %v513
        %609 = vmatpush1.bf16.msra.mxu0 %v512
        %610 = vmatprep.subr.bf16.mxu0 %v515
        %611 = vmatpush1.bf16.msra.mxu0 %v514
        %612 = vmatprep.mubr.bf16.mxu0 %v257
        %613 = vmatmul.mubr.bf16.gmra.mrb[0].mxu0 %v256
        %v614 = vpop.f32.mrb[0].mxu0
        %v615 = vadd.f32 %v333, %v614
        %v616 = vpop.f32.mrb[0].mxu0
        %v617 = vadd.f32 %v337, %v616
        %v618 = vpop.f32.mrb[0].mxu0
        %v619 = vadd.f32 %v333, %v618
        %v620 = vpop.f32.mrb[0].mxu0
        %v621 = vadd.f32 %v337, %v620
        %622 = vmatprep.mubr.bf16.mxu0 %v260
        %623 = vmatmul.mubr.bf16.gmra.mrb[0].mxu0 %v259
        %v624 = vpop.f32.mrb[0].mxu0
        %v625 = vadd.f32 %v333, %v624
        %v626 = vpop.f32.mrb[0].mxu0
        %v627 = vadd.f32 %v337, %v626
        %v628 = vpop.f32.mrb[0].mxu0
        %v629 = vadd.f32 %v333, %v628
        %v630 = vpop.f32.mrb[0].mxu0
        %v631 = vadd.f32 %v337, %v630
        %632 = vmatprep.mubr.bf16.mxu0 %v263
        %633 = vmatmul.mubr.bf16.gmra.mrb[0].mxu0 %v262
        %v634 = vpop.f32.mrb[0].mxu0
        %v635 = vadd.f32 %v333, %v634
        %v636 = vpop.f32.mrb[0].mxu0
        %v637 = vadd.f32 %v337, %v636
        %v638 = vpop.f32.mrb[0].mxu0
        %v639 = vadd.f32 %v333, %v638
        %v640 = vpop.f32.mrb[0].mxu0
        %v641 = vadd.f32 %v337, %v640
        %642 = vmatprep.mubr.bf16.mxu0 %v266
        %643 = vmatmul.mubr.bf16.gmra.mrb[0].mxu0 %v265
        %v644 = vpop.f32.mrb[0].mxu0
        %v645 = vadd.f32 %v333, %v644
        %v646 = vpop.f32.mrb[0].mxu0
        %v647 = vadd.f32 %v337, %v646
        %v648 = vpop.f32.mrb[0].mxu0
        %v649 = vadd.f32 %v333, %v648
        %v650 = vpop.f32.mrb[0].mxu0
        %v651 = vadd.f32 %v337, %v650
        %652 = vmatprep.mubr.bf16.mxu0 %v269
        %653 = vmatmul.mubr.bf16.gmra.mrb[0].mxu0 %v268
        %v654 = vpop.f32.mrb[0].mxu0
        %v655 = vadd.f32 %v333, %v654
        %v656 = vpop.f32.mrb[0].mxu0
        %v657 = vadd.f32 %v337, %v656
        %v658 = vpop.f32.mrb[0].mxu0
        %v659 = vadd.f32 %v333, %v658
        %v660 = vpop.f32.mrb[0].mxu0
        %v661 = vadd.f32 %v337, %v660
        %662 = vmatprep.mubr.bf16.mxu0 %v272
        %663 = vmatmul.mubr.bf16.gmra.mrb[0].mxu0 %v271
        %v664 = vpop.f32.mrb[0].mxu0
        %v665 = vadd.f32 %v333, %v664
        %v666 = vpop.f32.mrb[0].mxu0
        %v667 = vadd.f32 %v337, %v666
        %v668 = vpop.f32.mrb[0].mxu0
        %v669 = vadd.f32 %v333, %v668
        %v670 = vpop.f32.mrb[0].mxu0
        %v671 = vadd.f32 %v337, %v670
        %672 = vmatprep.mubr.bf16.mxu0 %v275
        %673 = vmatmul.mubr.bf16.gmra.mrb[0].mxu0 %v274
        %v674 = vpop.f32.mrb[0].mxu0
        %v675 = vadd.f32 %v333, %v674
        %v676 = vpop.f32.mrb[0].mxu0
        %v677 = vadd.f32 %v337, %v676
        %v678 = vpop.f32.mrb[0].mxu0
        %v679 = vadd.f32 %v333, %v678
        %v680 = vpop.f32.mrb[0].mxu0
        %v681 = vadd.f32 %v337, %v680
        %682 = vmatprep.mubr.bf16.mxu0 %v278
        %683 = vmatmul.mubr.bf16.gmra.mrb[0].mxu0 %v277
        %v684 = vpop.f32.mrb[0].mxu0
        %v685 = vadd.f32 %v333, %v684
        %v686 = vpop.f32.mrb[0].mxu0
        %v687 = vadd.f32 %v337, %v686
        %v688 = vpop.f32.mrb[0].mxu0
        %v689 = vadd.f32 %v333, %v688
        %v690 = vpop.f32.mrb[0].mxu0
        %v691 = vadd.f32 %v337, %v690
        %692 = vdwg.mxu0
        %693 = vmatprep.subr.bf16.mxu0 %v517
        %694 = vmatpush1.bf16.msra.mxu0 %v516
        %695 = vmatprep.subr.bf16.mxu0 %v519
        %696 = vmatpush1.bf16.msra.mxu0 %v518
        %697 = vmatprep.subr.bf16.mxu0 %v521
        %698 = vmatpush1.bf16.msra.mxu0 %v520
        %699 = vmatprep.subr.bf16.mxu0 %v523
        %700 = vmatpush1.bf16.msra.mxu0 %v522
        %701 = vmatprep.subr.bf16.mxu0 %v525
        %702 = vmatpush1.bf16.msra.mxu0 %v524
        %703 = vmatprep.subr.bf16.mxu0 %v527
        %704 = vmatpush1.bf16.msra.mxu0 %v526
        %705 = vmatprep.subr.bf16.mxu0 %v529
        %706 = vmatpush1.bf16.msra.mxu0 %v528
        %707 = vmatprep.subr.bf16.mxu0 %v531
        %708 = vmatpush1.bf16.msra.mxu0 %v530
        %709 = vmatprep.subr.bf16.mxu0 0
        %710 = vmatpush1.bf16.msra.mxu0 0
        %711 = vmatprep.subr.bf16.mxu0 0
        %712 = vmatpush1.bf16.msra.mxu0 0
        %713 = vmatprep.subr.bf16.mxu0 0
        %714 = vmatpush1.bf16.msra.mxu0 0
        %715 = vmatprep.subr.bf16.mxu0 0
        %716 = vmatpush1.bf16.msra.mxu0 0
        %717 = vmatprep.subr.bf16.mxu0 0
        %718 = vmatpush1.bf16.msra.mxu0 0
        %719 = vmatprep.subr.bf16.mxu0 0
        %720 = vmatpush1.bf16.msra.mxu0 0
        %721 = vmatprep.subr.bf16.mxu0 0
        %722 = vmatpush1.bf16.msra.mxu0 0
        %723 = vmatprep.subr.bf16.mxu0 0
        %724 = vmatpush1.bf16.msra.mxu0 0
        %725 = vmatprep.mubr.bf16.mxu0 0
        %726 = vmatmul.mubr.bf16.gmra.mrb[0].mxu0 %v258
        %v727 = vpop.f32.mrb[0].mxu0
        %v728 = vadd.f32 %v615, %v727
        %v729 = vpop.f32.mrb[0].mxu0
        %v730 = vadd.f32 %v617, %v729
        %v731 = vpop.f32.mrb[0].mxu0
        %v732 = vadd.f32 %v619, %v731
        %v733 = vpop.f32.mrb[0].mxu0
        %v734 = vadd.f32 %v621, %v733
        %735 = vmatprep.mubr.bf16.mxu0 0
        %736 = vmatmul.mubr.bf16.gmra.mrb[0].mxu0 %v261
        %v737 = vpop.f32.mrb[0].mxu0
        %v738 = vadd.f32 %v625, %v737
        %v739 = vpop.f32.mrb[0].mxu0
        %v740 = vadd.f32 %v627, %v739
        %v741 = vpop.f32.mrb[0].mxu0
        %v742 = vadd.f32 %v629, %v741
        %v743 = vpop.f32.mrb[0].mxu0
        %v744 = vadd.f32 %v631, %v743
        %745 = vmatprep.mubr.bf16.mxu0 0
        %746 = vmatmul.mubr.bf16.gmra.mrb[0].mxu0 %v264
        %v747 = vpop.f32.mrb[0].mxu0
        %v748 = vadd.f32 %v635, %v747
        %v749 = vpop.f32.mrb[0].mxu0
        %v750 = vadd.f32 %v637, %v749
        %v751 = vpop.f32.mrb[0].mxu0
        %v752 = vadd.f32 %v639, %v751
        %v753 = vpop.f32.mrb[0].mxu0
        %v754 = vadd.f32 %v641, %v753
        %755 = vmatprep.mubr.bf16.mxu0 0
        %756 = vmatmul.mubr.bf16.gmra.mrb[0].mxu0 %v267
        %v757 = vpop.f32.mrb[0].mxu0
        %v758 = vadd.f32 %v645, %v757
        %v759 = vpop.f32.mrb[0].mxu0
        %v760 = vadd.f32 %v647, %v759
        %v761 = vpop.f32.mrb[0].mxu0
        %v762 = vadd.f32 %v649, %v761
        %v763 = vpop.f32.mrb[0].mxu0
        %v764 = vadd.f32 %v651, %v763
        %765 = vmatprep.mubr.bf16.mxu0 0
        %766 = vmatmul.mubr.bf16.gmra.mrb[0].mxu0 %v270
        %v767 = vpop.f32.mrb[0].mxu0
        %v768 = vadd.f32 %v655, %v767
        %v769 = vpop.f32.mrb[0].mxu0
        %v770 = vadd.f32 %v657, %v769
        %v771 = vpop.f32.mrb[0].mxu0
        %v772 = vadd.f32 %v659, %v771
        %v773 = vpop.f32.mrb[0].mxu0
        %v774 = vadd.f32 %v661, %v773
        %775 = vmatprep.mubr.bf16.mxu0 0
        %776 = vmatmul.mubr.bf16.gmra.mrb[0].mxu0 %v273
        %v777 = vpop.f32.mrb[0].mxu0
        %v778 = vadd.f32 %v665, %v777
        %v779 = vpop.f32.mrb[0].mxu0
        %v780 = vadd.f32 %v667, %v779
        %v781 = vpop.f32.mrb[0].mxu0
        %v782 = vadd.f32 %v669, %v781
        %v783 = vpop.f32.mrb[0].mxu0
        %v784 = vadd.f32 %v671, %v783
        %785 = vmatprep.mubr.bf16.mxu0 0
        %786 = vmatmul.mubr.bf16.gmra.mrb[0].mxu0 %v276
        %v787 = vpop.f32.mrb[0].mxu0
        %v788 = vadd.f32 %v675, %v787
        %v789 = vpop.f32.mrb[0].mxu0
        %v790 = vadd.f32 %v677, %v789
        %v791 = vpop.f32.mrb[0].mxu0
        %v792 = vadd.f32 %v679, %v791
        %v793 = vpop.f32.mrb[0].mxu0
        %v794 = vadd.f32 %v681, %v793
        %795 = vmatprep.mubr.bf16.mxu0 0
        %796 = vmatmul.mubr.bf16.gmra.mrb[0].mxu0 %v279
        %v797 = vpop.f32.mrb[0].mxu0
        %v798 = vadd.f32 %v685, %v797
        %v799 = vpop.f32.mrb[0].mxu0
        %v800 = vadd.f32 %v687, %v799
        %v801 = vpop.f32.mrb[0].mxu0
        %v802 = vadd.f32 %v689, %v801
        %v803 = vpop.f32.mrb[0].mxu0
        %v804 = vadd.f32 %v691, %v803
        %805 = vdwg.mxu0
        %806 = vst [vmem:[%s204] sm:$0xff] %v728
        %807 = vst [vmem:[%s204 + $0x8] sm:$0xff] %v730
        %808 = vst [vmem:[%s204 + $0x10] sm:$0xff] %v732
        %809 = vst [vmem:[%s204 + $0x18] sm:$0xff] %v734
        %810 = vst [vmem:[%s204 + $0x20] sm:$0xff] %v738
        %811 = vst [vmem:[%s204 + $0x28] sm:$0xff] %v740
        %812 = vst [vmem:[%s204 + $0x30] sm:$0xff] %v742
        %813 = vst [vmem:[%s204 + $0x38] sm:$0xff] %v744
        %814 = vst [vmem:[%s204 + $0x40] sm:$0xff] %v748
        %815 = vst [vmem:[%s204 + $0x48] sm:$0xff] %v750
        %816 = vst [vmem:[%s204 + $0x50] sm:$0xff] %v752
        %817 = vst [vmem:[%s204 + $0x58] sm:$0xff] %v754
        %818 = vst [vmem:[%s204 + $0x60] sm:$0xff] %v758
        %819 = vst [vmem:[%s204 + $0x68] sm:$0xff] %v760
        %820 = vst [vmem:[%s204 + $0x70] sm:$0xff] %v762
        %821 = vst [vmem:[%s204 + $0x78] sm:$0xff] %v764
        %822 = vst [vmem:[%s204 + $0x80] sm:$0xff] %v768
        %823 = vst [vmem:[%s204 + $0x88] sm:$0xff] %v770
        %824 = vst [vmem:[%s204 + $0x90] sm:$0xff] %v772
        %825 = vst [vmem:[%s204 + $0x98] sm:$0xff] %v774
        %826 = vst [vmem:[%s204 + $0xa0] sm:$0xff] %v778
        %827 = vst [vmem:[%s204 + $0xa8] sm:$0xff] %v780
        %828 = vst [vmem:[%s204 + $0xb0] sm:$0xff] %v782
        %829 = vst [vmem:[%s204 + $0xb8] sm:$0xff] %v784
        %830 = vst [vmem:[%s204 + $0xc0] sm:$0xff] %v788
        %831 = vst [vmem:[%s204 + $0xc8] sm:$0xff] %v790
        %832 = vst [vmem:[%s204 + $0xd0] sm:$0xff] %v792
        %833 = vst [vmem:[%s204 + $0xd8] sm:$0xff] %v794
        %834 = vst [vmem:[%s204 + $0xe0] sm:$0xff] %v798
        %835 = vst [vmem:[%s204 + $0xe8] sm:$0xff] %v800
        %836 = vst [vmem:[%s204 + $0xf0] sm:$0xff] %v802
        %837 = vst [vmem:[%s204 + $0xf8] sm:$0xff] %v804
        %s838 = sand.u32 %s97, 1
        %s839 = scalar_lea.sflag [#allocation4], %s838
        %s840 = sand.u32 %s97, 1
        %s841 = smul.addr %s840, 256
        %s842 = scalar_lea.vmem [#allocation7], %s841
        // Predicated region
        $region41: #{tpu_custom_call.1} parent=31 // pred_check
          %p843 = pneg %p107
        $region42: #{tpu_custom_call.1} parent=31 // pred_check_branch
          %845 = sbr.rel (%p843) target = $region44
        $region43: #{tpu_custom_call.1} parent=31 // pred_region
          %s846 = smul.u32 16, %s21
          %s848 = ssub.s32 4096, 4096
          %849 = vsyncadd %s839, %s848
          %s850 = smul.addr %s846, 2
          %s851 = smul.addr %s850, 128
          %s852 = scalar_lea.hbm %s3, %s851
          %s853 = sshll.u32 %s842, 4
          %s854 = int_to_ptr.vmem [resolvable:$true] %s853
          %859 = dma.vmem_to_hbm [thread:$0]  %s854, 4096, %s852, %s839, 256, 256, 16
        $region44: #{tpu_custom_call.1} parent=31 // pred_fallthru
          _
      $region32: #{tpu_custom_call.1} parent=5 // pred_fallthru
        _
      %p860 = scmp.le.s32.totalorder 2, %s16
      // Predicated region
      $region45: #{tpu_custom_call.1} parent=5 // pred_check
        %p861 = pneg %p860
      $region46: #{tpu_custom_call.1} parent=5 // pred_check_branch
        %863 = sbr.rel (%p861) target = $region48
      $region47: #{tpu_custom_call.1} parent=5 // pred_region
        %s864 = ssub.s32 %s16, 2
        // Predicated region
        $region49: #{tpu_custom_call.1} parent=47 // pred_check
          %p865 = pneg %p113
        $region50: #{tpu_custom_call.1} parent=47 // pred_check_branch
          %867 = sbr.rel (%p865) target = $region52
        $region51: #{tpu_custom_call.1} parent=47 // pred_region
          %s868 = sand.u32 %s98, 1
          %s869 = scalar_lea.sflag [#allocation4], %s868
          %s870 = sand.u32 %s98, 1
          %s871 = smul.addr %s870, 256
          %s872 = scalar_lea.vmem [#allocation7], %s871
          %873 = dma.done %s869, 4096
        $region52: #{tpu_custom_call.1} parent=47 // pred_fallthru
          _
      $region48: #{tpu_custom_call.1} parent=5 // pred_fallthru
        _
    $region6: #{tpu_custom_call.1} parent=1 // loop_footer
      %s20 = sadd.s32 1, %s16
    $region7: #{tpu_custom_call.1} parent=1 // loop_footer_branch
      %15 = sbr.rel target = $region3
    $region8: #{tpu_custom_call.1} parent=1 // loop_exit
      _
    %874 = vsyncpa [#allocation3], 1
    %s875 = scalar_lea.sflag [#allocation3], 1
    %876 = vsyncpa %s875, 1
    %877 = vsyncpa [#allocation6], 1
    %878 = vsyncpa [#allocation4], 1
    %s879 = scalar_lea.sflag [#allocation4], 1
    %880 = vsyncpa %s879, 1

</llo_original>
